<compile_context>
chip_gen: v7x
topology: tpu7x:2x2x1
jax: 0.10.0
libtpu: 0.0.40
codegen_flags: <defaults>
</compile_context>

<pallas_src>
import functools
import math

import jax
import jax.numpy as jnp
from jax.experimental import pallas as pl
from jax.experimental.pallas import tpu as pltpu


def _tile(dim, target):
    """Largest divisor of `dim` that is <= target (power-of-two friendly)."""
    return max(1, math.gcd(dim, target))


# --------------------------------------------------------------------------
# Tiled matmul (bf16 operands, f32 accumulation)
# --------------------------------------------------------------------------
def _matmul_kernel(x_ref, w_ref, o_ref, acc_ref):
    @pl.when(pl.program_id(2) == 0)
    def _():
        acc_ref[...] = jnp.zeros(acc_ref.shape, jnp.float32)

    acc_ref[...] += jnp.dot(x_ref[...], w_ref[...],
                            preferred_element_type=jnp.float32)

    @pl.when(pl.program_id(2) == pl.num_programs(2) - 1)
    def _():
        o_ref[...] = acc_ref[...].astype(o_ref.dtype)


def matmul(x, w_t, *, tm_t=256, tn_t=256, tk_t=512, out_dtype=None):
    """y = x @ w_t   (w_t stored as (K, N))."""
    M, K = x.shape
    _, N = w_t.shape
    out_dtype = out_dtype or x.dtype
    tm, tn, tk = _tile(M, tm_t), _tile(N, tn_t), _tile(K, tk_t)
    return pl.pallas_call(
        _matmul_kernel,
        out_shape=jax.ShapeDtypeStruct((M, N), out_dtype),
        grid=(M // tm, N // tn, K // tk),
        in_specs=[pl.BlockSpec((tm, tk), lambda i, j, k: (i, k)),
                  pl.BlockSpec((tk, tn), lambda i, j, k: (k, j))],
        out_specs=pl.BlockSpec((tm, tn), lambda i, j, k: (i, j)),
        scratch_shapes=[pltpu.VMEM((tm, tn), jnp.float32)],
        compiler_params=pltpu.CompilerParams(
            dimension_semantics=("parallel", "parallel", "arbitrary"),
            vmem_limit_bytes=64 * 1024 * 1024),
    )(x, w_t)


# --------------------------------------------------------------------------
# RMSNorm (row-tiled, f32 math, bf16 in/out)
# --------------------------------------------------------------------------
def _rmsnorm_kernel(x_ref, w_ref, o_ref, *, eps):
    x = x_ref[...].astype(jnp.float32)
    var = jnp.mean(x * x, axis=-1, keepdims=True)
    o_ref[...] = (x * jax.lax.rsqrt(var + eps) * w_ref[...]).astype(o_ref.dtype)


def rmsnorm(x, w, eps=1e-5, row_tile=256):
    S, H = x.shape
    ts = _tile(S, row_tile)
    return pl.pallas_call(
        functools.partial(_rmsnorm_kernel, eps=eps),
        out_shape=jax.ShapeDtypeStruct((S, H), x.dtype),
        grid=(S // ts,),
        in_specs=[pl.BlockSpec((ts, H), lambda i: (i, 0)),
                  pl.BlockSpec((1, H), lambda i: (0, 0))],
        out_specs=pl.BlockSpec((ts, H), lambda i: (i, 0)),
        compiler_params=pltpu.CompilerParams(
            dimension_semantics=("parallel",)),
    )(x, w.reshape(1, H))


def _add_rmsnorm_kernel(x_ref, res_ref, w_ref, o_ref, newres_ref, *, eps):
    s = x_ref[...].astype(jnp.float32) + res_ref[...].astype(jnp.float32)
    newres_ref[...] = s.astype(newres_ref.dtype)
    var = jnp.mean(s * s, axis=-1, keepdims=True)
    o_ref[...] = (s * jax.lax.rsqrt(var + eps) * w_ref[...]).astype(o_ref.dtype)


def add_rmsnorm(x, residual, w, eps=1e-5, row_tile=256):
    """vLLM RMSNorm(x, residual): residual' = x + residual; out = norm(residual')."""
    S, H = x.shape
    ts = _tile(S, row_tile)
    return pl.pallas_call(
        functools.partial(_add_rmsnorm_kernel, eps=eps),
        out_shape=(jax.ShapeDtypeStruct((S, H), x.dtype),
                   jax.ShapeDtypeStruct((S, H), x.dtype)),
        grid=(S // ts,),
        in_specs=[pl.BlockSpec((ts, H), lambda i: (i, 0)),
                  pl.BlockSpec((ts, H), lambda i: (i, 0)),
                  pl.BlockSpec((1, H), lambda i: (0, 0))],
        out_specs=(pl.BlockSpec((ts, H), lambda i: (i, 0)),
                   pl.BlockSpec((ts, H), lambda i: (i, 0))),
        compiler_params=pltpu.CompilerParams(
            dimension_semantics=("parallel",)),
    )(x, residual, w.reshape(1, H))


# --------------------------------------------------------------------------
# Flash-style causal attention with fused neox RoPE (GQA)
# --------------------------------------------------------------------------
def _flash_attn_kernel(q_ref, k_ref, v_ref, cosq_ref, sinq_ref, cosk_ref,
                       sink_ref, o_ref, m_ref, l_ref, acc_ref, *, scale, tq, tkv):
    qi = pl.program_id(1)
    ki = pl.program_id(2)
    nk = pl.num_programs(2)

    @pl.when(ki == 0)
    def _():
        m_ref[...] = jnp.full(m_ref.shape, -1e30, jnp.float32)
        l_ref[...] = jnp.zeros(l_ref.shape, jnp.float32)
        acc_ref[...] = jnp.zeros(acc_ref.shape, jnp.float32)

    q_start = qi * tq
    k_start = ki * tkv

    # causal block skipping: blocks strictly above the diagonal do no work
    @pl.when(k_start <= q_start + tq - 1)
    def _():
        d2 = q_ref.shape[-1] // 2

        def rope(x, cos, sin):
            rot = jnp.concatenate([-x[:, d2:], x[:, :d2]], axis=-1)
            return x * cos + rot * sin

        q = rope(q_ref[0].astype(jnp.float32), cosq_ref[...], sinq_ref[...])
        k = rope(k_ref[0].astype(jnp.float32), cosk_ref[...], sink_ref[...])
        v = v_ref[0]

        s = jax.lax.dot_general(
            q.astype(jnp.bfloat16), k.astype(jnp.bfloat16),
            (((1,), (1,)), ((), ())),
            preferred_element_type=jnp.float32) * scale

        row = q_start + jax.lax.broadcasted_iota(jnp.int32, s.shape, 0)
        col = k_start + jax.lax.broadcasted_iota(jnp.int32, s.shape, 1)
        s = jnp.where(col <= row, s, -1e30)

        m_prev = m_ref[...]
        m_new = jnp.maximum(m_prev, jnp.max(s, axis=-1, keepdims=True))
        alpha = jnp.exp(m_prev - m_new)
        p = jnp.exp(s - m_new)
        l_ref[...] = alpha * l_ref[...] + jnp.sum(p, axis=-1, keepdims=True)
        acc_ref[...] = alpha * acc_ref[...] + jnp.dot(
            p.astype(jnp.bfloat16), v, preferred_element_type=jnp.float32)
        m_ref[...] = m_new

    @pl.when(ki == nk - 1)
    def _():
        inv_l = pl.reciprocal(l_ref[...], approx=True)
        o_ref[0] = (acc_ref[...] * inv_l).astype(o_ref.dtype)


def attention(q, k, v, cos, sin, scale, *, tq_t=256, tkv_t=256):
    """Causal GQA attention.  q: (H, S, D), k/v: (KH, S, D) -> (H, S, D)."""
    Hh, S, D = q.shape
    KH = k.shape[0]
    group = Hh // KH
    tq = _tile(S, tq_t)
    tkv = _tile(S, tkv_t)
    return pl.pallas_call(
        functools.partial(_flash_attn_kernel, scale=scale, tq=tq, tkv=tkv),
        out_shape=jax.ShapeDtypeStruct((Hh, S, D), q.dtype),
        grid=(Hh, S // tq, S // tkv),
        in_specs=[
            pl.BlockSpec((1, tq, D), lambda h, qi, ki: (h, qi, 0)),
            pl.BlockSpec((1, tkv, D), lambda h, qi, ki: (h // group, ki, 0)),
            pl.BlockSpec((1, tkv, D), lambda h, qi, ki: (h // group, ki, 0)),
            pl.BlockSpec((tq, D), lambda h, qi, ki: (qi, 0)),   # cos for q rows
            pl.BlockSpec((tq, D), lambda h, qi, ki: (qi, 0)),   # sin for q rows
            pl.BlockSpec((tkv, D), lambda h, qi, ki: (ki, 0)),  # cos for k rows
            pl.BlockSpec((tkv, D), lambda h, qi, ki: (ki, 0)),  # sin for k rows
        ],
        out_specs=pl.BlockSpec((1, tq, D), lambda h, qi, ki: (h, qi, 0)),
        scratch_shapes=[pltpu.VMEM((tq, 1), jnp.float32),
                        pltpu.VMEM((tq, 1), jnp.float32),
                        pltpu.VMEM((tq, D), jnp.float32)],
        compiler_params=pltpu.CompilerParams(
            dimension_semantics=("parallel", "parallel", "arbitrary"),
            vmem_limit_bytes=64 * 1024 * 1024),
    )(q, k, v, cos, sin, cos, sin)


# --------------------------------------------------------------------------
# MoE: fused gate + softmax + top-k routing, expert-streamed GEMMs
# --------------------------------------------------------------------------
def _moe_kernel(x_ref, gate_ref, w1_ref, w3_ref, w2_ref, o_ref,
                sel_ref, acc_ref, *, top_k):
    e = pl.program_id(1)
    ne = pl.num_programs(1)

    @pl.when(e == 0)
    def _():
        acc_ref[...] = jnp.zeros(acc_ref.shape, jnp.float32)
        # router: gate matmul + softmax + top-k (renormalize=False), all in f32
        logits = jnp.dot(x_ref[...], gate_ref[...],
                         preferred_element_type=jnp.float32)
        probs = jax.nn.softmax(logits, axis=-1)
        E = probs.shape[-1]
        idx = jax.lax.broadcasted_iota(jnp.int32, probs.shape, 1)
        remaining = probs
        sel = jnp.zeros_like(probs)
        for _ in range(top_k):
            m = jnp.max(remaining, axis=-1, keepdims=True)
            cand = jnp.where(remaining == m, idx, E)
            first = idx == jnp.min(cand, axis=-1, keepdims=True)
            sel = sel + jnp.where(first, probs, 0.0)
            remaining = jnp.where(first, -1.0, remaining)
        sel_ref[...] = sel

    # routing weight of expert `e` for each token in this tile -> (tt, 1)
    lane = jax.lax.broadcasted_iota(jnp.int32, sel_ref.shape, 1)
    w_e = jnp.sum(jnp.where(lane == e, sel_ref[...], 0.0),
                  axis=-1, keepdims=True)

    # skip experts that received no tokens in this tile
    @pl.when(jnp.sum(w_e) > 0.0)
    def _():
        x = x_ref[...]
        g = jnp.dot(x, w1_ref[0], preferred_element_type=jnp.float32)
        u = jnp.dot(x, w3_ref[0], preferred_element_type=jnp.float32)
        h = (g * jax.nn.sigmoid(g)) * u                    # SiLU(gate) * up, f32
        out_e = jnp.dot(h.astype(x.dtype), w2_ref[0],
                        preferred_element_type=jnp.float32)
        acc_ref[...] += w_e * out_e

    @pl.when(e == ne - 1)
    def _():
        o_ref[...] = acc_ref[...].astype(o_ref.dtype)


def moe(x, gate_w_t, w1_t, w3_t, w2_t, top_k, *, tt_t=256):
    T, H = x.shape
    E, _, I = w1_t.shape
    tt = _tile(T, tt_t)
    return pl.pallas_call(
        functools.partial(_moe_kernel, top_k=top_k),
        out_shape=jax.ShapeDtypeStruct((T, H), x.dtype),
        grid=(T // tt, E),
        in_specs=[
            pl.BlockSpec((tt, H), lambda ti, e: (ti, 0)),
            pl.BlockSpec((H, E), lambda ti, e: (0, 0)),
            pl.BlockSpec((1, H, I), lambda ti, e: (e, 0, 0)),
            pl.BlockSpec((1, H, I), lambda ti, e: (e, 0, 0)),
            pl.BlockSpec((1, I, H), lambda ti, e: (e, 0, 0)),
        ],
        out_specs=pl.BlockSpec((tt, H), lambda ti, e: (ti, 0)),
        scratch_shapes=[pltpu.VMEM((tt, E), jnp.float32),
                        pltpu.VMEM((tt, H), jnp.float32)],
        compiler_params=pltpu.CompilerParams(
            dimension_semantics=("parallel", "arbitrary"),
            vmem_limit_bytes=64 * 1024 * 1024),
    )(x, gate_w_t, w1_t, w3_t, w2_t)


# --------------------------------------------------------------------------
# Decoder layer (parameters + forward)
# --------------------------------------------------------------------------
def init_layer_params(key, cfg):
    H = cfg["hidden"]
    heads, kvh = cfg["heads"], cfg["kv_heads"]
    D = H // heads
    q_size, kv_size = heads * D, kvh * D
    E, I = cfg["experts"], cfg["interm"]
    lk = jax.random.split(key, 6)

    def lin(k, shape):
        return (jax.random.normal(k, shape, jnp.float32) * 0.02).astype(jnp.bfloat16)

    return {
        "qkv_w_t": lin(lk[0], (H, q_size + 2 * kv_size)),
        "o_w_t": lin(lk[1], (q_size, H)),
        "q_norm": jnp.ones((q_size,), jnp.float32),
        "k_norm": jnp.ones((kv_size,), jnp.float32),
        "gate_w_t": lin(lk[2], (H, E)),
        "w1_t": lin(lk[3], (E, H, I)),   # gate_proj, pre-transposed
        "w3_t": lin(lk[4], (E, H, I)),   # up_proj,   pre-transposed
        "w2_t": lin(lk[5], (E, I, H)),   # down_proj, pre-transposed
        "input_ln": jnp.ones((H,), jnp.float32),
        "post_ln": jnp.ones((H,), jnp.float32),
    }


def rope_tables(positions, head_dim, theta):
    inv_freq = 1.0 / (theta ** (jnp.arange(0, head_dim, 2, dtype=jnp.float32)
                                / head_dim))
    freqs = positions.astype(jnp.float32)[:, None] * inv_freq[None, :]
    cos = jnp.cos(freqs)
    sin = jnp.sin(freqs)
    # full-width (lane-dense) tables for the [x1, x2] -> [x1*c - x2*s, x2*c + x1*s]
    # rotate-half formulation: out = x * cos_full + rotate_half(x) * sin_full
    return (jnp.concatenate([cos, cos], axis=-1),
            jnp.concatenate([sin, sin], axis=-1))


def olmoe_decoder_layer(lp, hidden_states, residual, cos_full, sin_full, cfg):
    H = cfg["hidden"]
    heads, kvh = cfg["heads"], cfg["kv_heads"]
    D = H // heads
    q_size, kv_size = heads * D, kvh * D
    scale = D ** -0.5
    S = hidden_states.shape[0]

    # ---- input layernorm ----
    if residual is None:
        residual = hidden_states
        h = rmsnorm(hidden_states, lp["input_ln"])
    else:
        h, residual = add_rmsnorm(hidden_states, residual, lp["input_ln"])

    # ---- self attention ----
    qkv = matmul(h, lp["qkv_w_t"])
    q = qkv[:, :q_size]
    k = qkv[:, q_size:q_size + kv_size]
    v = qkv[:, q_size + kv_size:]
    q = rmsnorm(q, lp["q_norm"])       # RMSNorm over the full concatenated q
    k = rmsnorm(k, lp["k_norm"])       # RMSNorm over the full concatenated k

    qh = q.reshape(S, heads, D).transpose(1, 0, 2)
    kh = k.reshape(S, kvh, D).transpose(1, 0, 2)
    vh = v.reshape(S, kvh, D).transpose(1, 0, 2)
    attn = attention(qh, kh, vh, cos_full, sin_full, scale)
    attn = attn.transpose(1, 0, 2).reshape(S, q_size)
    h = matmul(attn, lp["o_w_t"])

    # ---- post-attention layernorm ----
    h, residual = add_rmsnorm(h, residual, lp["post_ln"])

    # ---- MoE MLP (gate + routing fused inside the kernel) ----
    h = moe(h, lp["gate_w_t"], lp["w1_t"], lp["w3_t"], lp["w2_t"], cfg["top_k"])
    return h, residual


# --------------------------------------------------------------------------
if __name__ == "__main__":
    cfg = dict(
        hidden=64,
        heads=4,
        kv_heads=2,
        interm=64,
        experts=8,
        top_k=2,
        layers=2,
        rope_theta=10000.0,
    )
    key = jax.random.PRNGKey(0)
    kh, *layer_keys = jax.random.split(key, 1 + cfg["layers"])
    layers = [init_layer_params(lk, cfg) for lk in layer_keys]

    seq = 8
    H = cfg["hidden"]
    D = H // cfg["heads"]
    hidden_states = jax.random.normal(kh, (seq, H), jnp.float32).astype(jnp.bfloat16)
    positions = jnp.arange(seq, dtype=jnp.int32)
    cos_full, sin_full = rope_tables(positions, D, cfg["rope_theta"])

    h = hidden_states
    residual = None
    for lp in layers:
        h, residual = olmoe_decoder_layer(lp, h, residual, cos_full, sin_full, cfg)

    jax.block_until_ready((h, residual))
    assert h.shape == (seq, H) and residual.shape == (seq, H)
    assert bool(jnp.all(jnp.isfinite(h.astype(jnp.float32))))
    print("KERNEL_OK")
</pallas_src>

<mosaic_0001>
module attributes {stable_mosaic.version = 11 : i64} {
  func.func @_rmsnorm_kernel(%arg0: i32, %arg1: memref<8x64xbf16, #tpu.memory_space<vmem>>, %arg2: memref<1x64xf32, #tpu.memory_space<vmem>>, %arg3: memref<8x64xbf16, #tpu.memory_space<vmem>>) attributes {dimension_semantics = [#tpu.dimension_semantics<parallel>], iteration_bounds = array<i64: 1>, scalar_prefetch = 0 : i64, scratch_operands = 0 : i64, tpu.core_type = #tpu.core_type<tc>, window_params = [{transform_indices = @transform_0, window_bounds = array<i64: 8, 64>}, {pipeline_mode = #tpu.pipeline_mode<synchronous>, transform_indices = @transform_1, window_bounds = array<i64: 1, 64>}, {transform_indices = @transform_2, window_bounds = array<i64: 8, 64>}]} {
    %c0 = arith.constant 0 : index
    %c0_0 = arith.constant 0 : index
    %0 = vector.load %arg1[%c0, %c0_0] : memref<8x64xbf16, #tpu.memory_space<vmem>>, vector<8x64xbf16>
    %1 = arith.extf %0 : vector<8x64xbf16> to vector<8x64xf32>
    %2 = arith.mulf %1, %1 : vector<8x64xf32>
    %cst = arith.constant dense<0.000000e+00> : vector<8xf32>
    %3 = vector.multi_reduction <add>, %2, %cst [1] : vector<8x64xf32> to vector<8xf32>
    %4 = vector.shape_cast %3 : vector<8xf32> to vector<8x1xf32>
    %cst_1 = arith.constant 6.400000e+01 : f32
    %5 = vector.broadcast %cst_1 : f32 to vector<8x1xf32>
    %6 = arith.divf %4, %5 : vector<8x1xf32>
    %cst_2 = arith.constant 9.99999974E-6 : f32
    %7 = vector.broadcast %cst_2 : f32 to vector<8x1xf32>
    %8 = arith.addf %6, %7 : vector<8x1xf32>
    %9 = math.rsqrt %8 : vector<8x1xf32>
    %10 = vector.broadcast %9 : vector<8x1xf32> to vector<8x64xf32>
    %11 = arith.mulf %1, %10 : vector<8x64xf32>
    %c0_3 = arith.constant 0 : index
    %c0_4 = arith.constant 0 : index
    %12 = vector.load %arg2[%c0_3, %c0_4] : memref<1x64xf32, #tpu.memory_space<vmem>>, vector<1x64xf32>
    %13 = vector.broadcast %12 : vector<1x64xf32> to vector<8x64xf32>
    %14 = arith.mulf %11, %13 : vector<8x64xf32>
    %15 = arith.truncf %14 : vector<8x64xf32> to vector<8x64xbf16>
    %c0_5 = arith.constant 0 : index
    %c0_6 = arith.constant 0 : index
    %16 = vector.load %arg3[%c0_5, %c0_6] : memref<8x64xbf16, #tpu.memory_space<vmem>>, vector<8x64xbf16>
    tpu.vector_store %arg3[%c0_5, %c0_6], %15 {strides = array<i32>} : memref<8x64xbf16, #tpu.memory_space<vmem>>, vector<8x64xbf16>,
    return
  }
  func.func @transform_0(%arg0: i32) -> (i32, i32) {
    %c0_i32 = arith.constant 0 : i32
    %c0_i32_0 = arith.constant 0 : i32
    return %arg0, %c0_i32 : i32, i32
  }
  func.func @transform_1(%arg0: i32) -> (i32, i32) {
    %c0_i32 = arith.constant 0 : i32
    %c0_i32_0 = arith.constant 0 : i32
    %c0_i32_1 = arith.constant 0 : i32
    return %c0_i32, %c0_i32_0 : i32, i32
  }
  func.func @transform_2(%arg0: i32) -> (i32, i32) {
    %c0_i32 = arith.constant 0 : i32
    %c0_i32_0 = arith.constant 0 : i32
    return %arg0, %c0_i32 : i32, i32
  }
}

</mosaic_0001>

<llo_original>
// kernel: tpu_custom_call.1
$region0: #{tpu_custom_call.1}
  #allocation0 [shape = 'u32[]', space=smem, size = 0x4, offset = 0x4, fixed_abs, tag = 'smem constant byte address 0x4 - core index']
  #allocation1 [shape = 'u32[144,128]{1,0:T(1,128)}', space=vmem, size = 0x12000, scoped, tag = 'internal scratch']
  %s0 = inlined_call_operand.hbm [shape: bf16[8,64], index: 0, kind: input, shape index: {}]
  %s1 = inlined_call_operand.vmem [shape: f32[1,64], index: 1, kind: input, shape index: {}]
  %s2 = inlined_call_operand.hbm [shape: bf16[8,64], index: 2, kind: output, shape index: {}]
  %s3 = sld [smem:[#allocation0]]
  $region22: #{tpu_custom_call.1} parent=0
    _
  %s5 = ssub.s32 1, %s3
  %s6 = scalar_select 0, %s5, %s3
  $region1: #{tpu_custom_call.1} parent=0
    #allocation2 [shape = 'u8[2048]{0}', space=vmem, size = 0x800, scoped, tag = 'input window, operand 0, single buffered']
    #allocation3 [shape = 's32[1]{0}', space=sflag, size = 0x4, scoped, tag = 'scoped memory for tpu_custom_call.1']
    #allocation4 [shape = 's32[1]{0}', space=sflag, size = 0x4, scoped, tag = 'scoped memory for tpu_custom_call.1']
    #allocation5 [shape = 'u8[2048]{0}', space=vmem, size = 0x800, scoped, tag = 'output window, operand 0, single buffered']
    %7 = vsyncpa [#allocation3], 0
    %8 = vsyncpa [#allocation4], 0
    // Predicated region
    $region2: #{tpu_custom_call.1} parent=1 // pred_check
      _
    $region3: #{tpu_custom_call.1} parent=1 // pred_check_branch
      %10 = sbr.rel (0) target = $region5
    $region4: #{tpu_custom_call.1} parent=1 // pred_region
      %s12 = ssub.s32 64, 64
      %13 = vsyncadd [#allocation3], %s12
      %s15 = sshll.u32 [#allocation2], 4
      %s16 = int_to_ptr.vmem [resolvable:$true] %s15
      %18 = dma.hbm_to_vmem [thread:$0]  %s0, 64, %s16, [#allocation3]
    $region5: #{tpu_custom_call.1} parent=1 // pred_fallthru
      _
    // Predicated region
    $region6: #{tpu_custom_call.1} parent=1 // pred_check
      _
    $region7: #{tpu_custom_call.1} parent=1 // pred_check_branch
      %20 = sbr.rel (0) target = $region9
    $region8: #{tpu_custom_call.1} parent=1 // pred_region
      _
    $region9: #{tpu_custom_call.1} parent=1 // pred_fallthru
      _
    // Predicated region
    $region10: #{tpu_custom_call.1} parent=1 // pred_check
      _
    $region11: #{tpu_custom_call.1} parent=1 // pred_check_branch
      %22 = sbr.rel (0) target = $region13
    $region12: #{tpu_custom_call.1} parent=1 // pred_region
      %23 = dma.done [#allocation3], 64
    $region13: #{tpu_custom_call.1} parent=1 // pred_fallthru
      _
    %v24 = vld [vmem:[#allocation2] sm:$0xf]
    %v25 = vunpack.c.l.bf16 %v24
    %v26 = vmul.f32 %v25, %v25
    %vm27 = vcmask 523264
    %v28 = vsel %vm27, %v26, 0.0
    %29 = vadd.xlane.f32.xlu0 %v28
    %v30 = vpop.xlane.xlu0 %29
    %v31 = vrcp.pop 64.0
    %v32 = vmul.f32 %v30, %v31
    %v33 = vadd.f32 %v32, 1e-05
    %v34 = vrsqrt.pop %v33
    %v35 = vmul.f32 %v25, %v34
    %v36 = vld [vmem:[%s1] sm:$0x1]
    %v38 = vlaneseq
    %v39 = vshrl.u32 %v38, 7
    %v40 = vsub.s32 0, %v39
    %v41 = vrot.slane %v36, %v40
    %v43 = vmul.f32 %v35, %v41
    %v44 = vpack.c.bf16 %v43, %v43
    %vm45 = vcmask 519168
    %46 = vst.msk [vmem:[#allocation5] sm:$0xf] %vm45, %v44
    // Predicated region
    $region14: #{tpu_custom_call.1} parent=1 // pred_check
      _
    $region15: #{tpu_custom_call.1} parent=1 // pred_check_branch
      %48 = sbr.rel (0) target = $region17
    $region16: #{tpu_custom_call.1} parent=1 // pred_region
      %s50 = ssub.s32 64, 64
      %51 = vsyncadd [#allocation4], %s50
      %s53 = sshll.u32 [#allocation5], 4
      %s54 = int_to_ptr.vmem [resolvable:$true] %s53
      %56 = dma.vmem_to_hbm [thread:$0]  %s54, 64, %s2, [#allocation4]
    $region17: #{tpu_custom_call.1} parent=1 // pred_fallthru
      _
    // Predicated region
    $region18: #{tpu_custom_call.1} parent=1 // pred_check
      _
    $region19: #{tpu_custom_call.1} parent=1 // pred_check_branch
      %58 = sbr.rel (0) target = $region21
    $region20: #{tpu_custom_call.1} parent=1 // pred_region
      %59 = dma.done [#allocation4], 64
    $region21: #{tpu_custom_call.1} parent=1 // pred_fallthru
      _
    %60 = vsyncpa [#allocation3], 1
    %61 = vsyncpa [#allocation4], 1

</llo_original>
